<compile_context>
chip_gen: v7x
topology: tpu7x:2x2x1
jax: 0.10.0
libtpu: 0.0.40
codegen_flags: <defaults>
</compile_context>

<pallas_src>
import functools

import numpy as np
import jax
import jax.numpy as jnp
from jax.experimental import pallas as pl
from jax.experimental.pallas import tpu as pltpu


_TARGET_BLOCK_BYTES = 1 << 20    # ~1 MiB per mel input block (HBM roofline sweet spot)
_MAX_BLOCK_BYTES = 2 << 20       # hard cap: 3 inputs x 2 buffers + f32 acc << 32 MiB
_PAD_LANE_TILE = 512             # lane width of the (rare) copy fallback layout
_PAD_MAX_ROW_TILE = 512          # up to 1 MiB f32 blocks in the fallback
_OUT_LANES = 128                 # packed scalar-loss output lane width
_VMEM_LIMIT_BYTES = 32 * 1024 * 1024


# ----------------------------- Pallas kernel --------------------------------
def _make_kernel(inv_mel_n, inv_gate_n):
    def kernel(mel_out_ref, mel_post_ref, mel_tgt_ref,
               gate_out_ref, gate_tgt_ref, mu_ref, logvar_ref,
               out_ref, acc_ref):
        c = pl.program_id(0)   # core-split index ("parallel")
        t = pl.program_id(1)   # streamed row-block index ("arbitrary")

        @pl.when(t == 0)
        def _init():
            acc_ref[...] = jnp.zeros_like(acc_ref)

        # ---- streamed mel squared-error partials: pure VPU adds, full-vreg
        # stores (no per-step cross-sublane reduce, no masked (1,N) RMW).
        mt = mel_tgt_ref[...].astype(jnp.float32)
        d1 = mel_out_ref[...].astype(jnp.float32) - mt
        d2 = mel_post_ref[...].astype(jnp.float32) - mt
        acc_ref[...] += d1 * d1 + d2 * d2

        # ---- finalize once per core split: reduce acc, BCE + KL, pack ------
        @pl.when(t == pl.num_programs(1) - 1)
        def _finalize():
            mel_part = jnp.sum(acc_ref[...], keepdims=True) * inv_mel_n     # (1,1)

            # gate / KL terms are global: emit them from split 0 only so the
            # host-side sum over splits does not double-count them.
            primary = jnp.where(c == 0, 1.0, 0.0)

            x = gate_out_ref[...].astype(jnp.float32)      # natural (B, T)
            y = gate_tgt_ref[...].astype(jnp.float32)
            bce = jnp.maximum(x, 0.0) - x * y + jnp.log1p(jnp.exp(-jnp.abs(x)))
            gate_loss = jnp.sum(bce, keepdims=True) * inv_gate_n * primary  # (1,1)

            mu = mu_ref[...].astype(jnp.float32)           # natural (B, latent)
            lv = logvar_ref[...].astype(jnp.float32)
            kl = (-0.5) * jnp.sum(1.0 + lv - mu * mu - jnp.exp(lv),
                                  keepdims=True) * primary                  # (1,1)

            lane = jax.lax.broadcasted_iota(jnp.int32, out_ref.shape, 1)
            out_ref[...] = (jnp.where(lane == 0, mel_part, 0.0)
                            + jnp.where(lane == 1, gate_loss, 0.0)
                            + jnp.where(lane == 2, kl, 0.0))
    return kernel


# --------------------------- mel layout selection ----------------------------
def _mult8_divisors(n):
    divs = set()
    i = 1
    while i * i <= n:
        if n % i == 0:
            for d in (i, n // i):
                if d % 8 == 0:
                    divs.add(d)
        i += 1
    return divs


@functools.lru_cache(maxsize=None)
def _choose_mel_layout(n_elems, last_dim, itemsize):
    """Pick the mel streaming layout.

    Returns (mode, rows, lanes, blk_r):
      mode == "view": zero-copy reshape to (rows, lanes=last_dim)
      mode == "pad" : flatten + zero-pad to (rows, _PAD_LANE_TILE) (copies; rare)
    """
    lanes = int(last_dim)
    rows = n_elems // lanes
    row_bytes = lanes * itemsize

    if rows % 8 == 0:
        target_rows = max(8, _TARGET_BLOCK_BYTES // max(1, row_bytes))
        cands = [d for d in _mult8_divisors(rows) if d <= target_rows]
        blk_r = max(cands) if cands else 8
        if blk_r * row_bytes <= _MAX_BLOCK_BYTES:
            return ("view", rows, lanes, blk_r)
    elif rows * row_bytes <= _MAX_BLOCK_BYTES:
        # no multiple-of-8 divisor exists: whole rows as one full-extent block
        return ("view", rows, lanes, rows)

    # ---- fallback: flatten + zero-pad (materializes a copy; rare) ----------
    flat_rows = -(-n_elems // _PAD_LANE_TILE)
    pad_cap = max(8, flat_rows // 64)          # <= ~1.5% wasted rows
    blk_r = 8
    for blk in range(8, _PAD_MAX_ROW_TILE + 1, 8):
        pad = -(-flat_rows // blk) * blk - flat_rows
        if pad <= pad_cap:
            blk_r = blk                        # largest block within pad budget
    rows_padded = -(-flat_rows // blk_r) * blk_r
    return ("pad", rows_padded, _PAD_LANE_TILE, blk_r)


# ------------------------------ host wrapper ---------------------------------
def _vae_loss_terms(mel_out, mel_out_postnet, mel_target,
                    gate_out, gate_target, mu, logvar):
    mel_out = jnp.asarray(mel_out)
    mel_out_postnet = jnp.asarray(mel_out_postnet)
    mel_target = jnp.asarray(mel_target)
    gate_out = jnp.asarray(gate_out)
    gate_target = jnp.asarray(gate_target)
    mu = jnp.asarray(mu)
    logvar = jnp.asarray(logvar)

    assert mel_out.shape == mel_out_postnet.shape == mel_target.shape
    n_mel = int(np.prod(mel_out.shape))
    n_gate = int(np.prod(gate_out.shape))
    n_lat = int(np.prod(mu.shape))

    itemsize = int(jnp.dtype(mel_out.dtype).itemsize)
    mode, rows, lanes, blk_r = _choose_mel_layout(
        n_mel, int(mel_out.shape[-1]), itemsize)

    if mode == "view":
        def _prep(x):                         # free view: merge leading dims
            return x.reshape(rows, lanes)
    else:
        total = rows * lanes

        def _prep(x):                         # rare: materializes a padded copy
            flat = x.reshape(-1)
            if total != n_mel:
                flat = jnp.pad(flat, (0, total - n_mel))
            return flat.reshape(rows, lanes)

    mo, mp, mt = _prep(mel_out), _prep(mel_out_postnet), _prep(mel_target)

    # small tensors keep their natural 2-D shapes (full-array resident blocks)
    def _as2d(x):
        if x.ndim == 2:
            return x
        if x.ndim <= 1:
            return x.reshape(1, -1)
        return x.reshape(-1, x.shape[-1])

    go, gt = _as2d(gate_out), _as2d(gate_target)
    mu2, lv2 = _as2d(mu), _as2d(logvar)

    total_blocks = rows // blk_r
    n_split = 2 if (total_blocks >= 2 and total_blocks % 2 == 0) else 1
    steps = total_blocks // n_split

    mel_spec = pl.BlockSpec((blk_r, lanes), lambda c, t: (c * steps + t, 0))

    def _small_spec(a):
        return pl.BlockSpec(a.shape, lambda c, t: (0, 0))

    cost = pl.CostEstimate(
        flops=6 * n_mel + 5 * n_gate + 6 * n_lat,
        transcendentals=2 * n_gate + n_lat,
        bytes_accessed=(3 * n_mel * itemsize
                        + 2 * n_gate * int(jnp.dtype(gate_out.dtype).itemsize)
                        + 2 * n_lat * int(jnp.dtype(mu.dtype).itemsize)
                        + n_split * 8 * _OUT_LANES * 4),
    )

    out = pl.pallas_call(
        _make_kernel(1.0 / n_mel, 1.0 / n_gate),
        out_shape=jax.ShapeDtypeStruct((n_split * 8, _OUT_LANES), jnp.float32),
        grid=(n_split, steps),
        in_specs=[mel_spec, mel_spec, mel_spec,
                  _small_spec(go), _small_spec(gt),
                  _small_spec(mu2), _small_spec(lv2)],
        out_specs=pl.BlockSpec((8, _OUT_LANES), lambda c, t: (c, 0)),
        scratch_shapes=[pltpu.VMEM((blk_r, lanes), jnp.float32)],
        compiler_params=pltpu.CompilerParams(
            dimension_semantics=("parallel", "arbitrary"),
            vmem_limit_bytes=_VMEM_LIMIT_BYTES),
        cost_estimate=cost,
    )(mo, mp, mt, go, gt, mu2, lv2)

    per_split = out.reshape(n_split, 8, _OUT_LANES)[:, 0, :]   # (n_split, 128)
    packed = jnp.sum(per_split, axis=0)                        # (128,)
    return packed[0], packed[1], packed[2]


# ----------------------------- host-side module -------------------------------
class Tacotron2LossVAE:
    def __init__(self, anneal_function='logistic', anneal_lag=0, anneal_k=0.0025,
                 anneal_x0=10000, anneal_upper=0.2, anneal_constant=0.001):
        self.anneal_function = anneal_function
        self.lag = anneal_lag
        self.k = anneal_k
        self.x0 = anneal_x0
        self.upper = anneal_upper
        self.constant = anneal_constant

    def kl_anneal_function(self, anneal_function, lag, step, k, x0, upper, constant):
        if step >= lag:
            if anneal_function == 'logistic':
                return float(upper / (1 + np.exp(-k * (step - x0))))
            elif anneal_function == 'linear':
                return min(upper, (step - lag) / x0)
            elif anneal_function == 'constant':
                return constant
        else:
            return 0

    def __call__(self, model_output, targets, step):
        mel_target, gate_target = targets[0], targets[1]
        mel_out, mel_out_postnet, gate_out, _, mu, logvar, _, _ = model_output

        mel_loss, gate_loss, kl_loss = _vae_loss_terms(
            mel_out, mel_out_postnet, mel_target,
            gate_out, gate_target, mu, logvar)

        kl_weight = self.kl_anneal_function(
            self.anneal_function, self.lag, step, self.k, self.x0,
            self.upper, self.constant)

        recon_loss = mel_loss + gate_loss
        weighted_kl_loss = kl_weight * kl_loss
        total_loss = recon_loss + weighted_kl_loss
        return total_loss, recon_loss, kl_loss, kl_weight


# ------------------------------- demo / test ----------------------------------
def _reference(mel_out, mel_post, mel_tgt, gate_out, gate_tgt, mu, logvar, kl_w):
    mo = np.asarray(mel_out, np.float64)
    mp = np.asarray(mel_post, np.float64)
    mt = np.asarray(mel_tgt, np.float64)
    x = np.asarray(gate_out, np.float64)
    y = np.asarray(gate_tgt, np.float64)
    m = np.asarray(mu, np.float64)
    lv = np.asarray(logvar, np.float64)
    mel = ((mo - mt) ** 2).mean() + ((mp - mt) ** 2).mean()
    gate = (np.maximum(x, 0.0) - x * y + np.log1p(np.exp(-np.abs(x)))).mean()
    kl = -0.5 * np.sum(1.0 + lv - m * m - np.exp(lv))
    return mel + gate + kl_w * kl, mel + gate, kl


def _run_case(key, mel_shape, gate_shape, lat_shape, step):
    ks = jax.random.split(key, 7)
    mel_out = jax.random.normal(ks[0], mel_shape, dtype=jnp.float32)
    mel_post = jax.random.normal(ks[1], mel_shape, dtype=jnp.float32)
    mel_tgt = jax.random.normal(ks[2], mel_shape, dtype=jnp.float32)
    gate_out = jax.random.normal(ks[3], gate_shape, dtype=jnp.float32)
    gate_tgt = (jax.random.uniform(ks[4], gate_shape) > 0.5).astype(jnp.float32)
    mu = jax.random.normal(ks[5], lat_shape, dtype=jnp.float32)
    logvar = 0.1 * jax.random.normal(ks[6], lat_shape, dtype=jnp.float32)

    loss_fn = Tacotron2LossVAE(anneal_function='logistic', anneal_lag=0,
                               anneal_k=0.0025, anneal_x0=10000,
                               anneal_upper=0.2, anneal_constant=0.001)
    model_output = (mel_out, mel_post, gate_out, None, mu, logvar, None, None)
    targets = (mel_tgt, gate_tgt)

    total, recon, kl, kl_w = loss_fn(model_output, targets, step)
    jax.block_until_ready((total, recon, kl))

    ref_total, ref_recon, ref_kl = _reference(
        mel_out, mel_post, mel_tgt, gate_out, gate_tgt, mu, logvar, kl_w)
    assert np.allclose(float(total), ref_total, rtol=5e-4, atol=1e-5), \
        (float(total), ref_total)
    assert np.allclose(float(recon), ref_recon, rtol=5e-4, atol=1e-5), \
        (float(recon), ref_recon)
    assert np.allclose(float(kl), ref_kl, rtol=5e-4, atol=1e-5), \
        (float(kl), ref_kl)


if __name__ == "__main__":
    key = jax.random.PRNGKey(0)
    k1, k2, k3, k4 = jax.random.split(key, 4)

    # small canonical case: zero-copy view, single block, single split
    _run_case(k1, (2, 8, 16), (2, 16), (2, 32), step=100)
    # multi-block streaming + 2-way core split (grid (2, 2))
    _run_case(k2, (4, 80, 2000), (4, 2000), (4, 32), step=100)
    # rows not a multiple of 8 -> whole-rows single full-extent block
    _run_case(k3, (3, 10, 50), (3, 50), (3, 7), step=0)
    # very wide last dim -> padded (rows, 512) fallback layout, multi-step acc
    _run_case(k4, (1, 8, 70000), (2, 100), (2, 16), step=20000)

    print("KERNEL_OK")
</pallas_src>

<mosaic_0001>
module attributes {stable_mosaic.version = 11 : i64} {
  func.func @kernel(%arg0: i32, %arg1: i32, %arg2: memref<16x16xf32, #tpu.memory_space<vmem>>, %arg3: memref<16x16xf32, #tpu.memory_space<vmem>>, %arg4: memref<16x16xf32, #tpu.memory_space<vmem>>, %arg5: memref<2x16xf32, #tpu.memory_space<vmem>>, %arg6: memref<2x16xf32, #tpu.memory_space<vmem>>, %arg7: memref<2x32xf32, #tpu.memory_space<vmem>>, %arg8: memref<2x32xf32, #tpu.memory_space<vmem>>, %arg9: memref<8x128xf32, #tpu.memory_space<vmem>>, %arg10: memref<16x16xf32, #tpu.memory_space<vmem>>) attributes {dimension_semantics = [#tpu.dimension_semantics<parallel>, #tpu.dimension_semantics<arbitrary>], iteration_bounds = array<i64: 1, 1>, scalar_prefetch = 0 : i64, scratch_operands = 1 : i64, tpu.core_type = #tpu.core_type<tc>, window_params = [{transform_indices = @transform_0, window_bounds = array<i64: 16, 16>}, {transform_indices = @transform_1, window_bounds = array<i64: 16, 16>}, {transform_indices = @transform_2, window_bounds = array<i64: 16, 16>}, {pipeline_mode = #tpu.pipeline_mode<synchronous>, transform_indices = @transform_3, window_bounds = array<i64: 2, 16>}, {pipeline_mode = #tpu.pipeline_mode<synchronous>, transform_indices = @transform_4, window_bounds = array<i64: 2, 16>}, {pipeline_mode = #tpu.pipeline_mode<synchronous>, transform_indices = @transform_5, window_bounds = array<i64: 2, 32>}, {pipeline_mode = #tpu.pipeline_mode<synchronous>, transform_indices = @transform_6, window_bounds = array<i64: 2, 32>}, {transform_indices = @transform_7, window_bounds = array<i64: 8, 128>}]} {
    %c0_i32 = arith.constant 0 : i32
    %0 = arith.cmpi eq, %arg1, %c0_i32 : i32
    %1 = arith.extui %0 : i1 to i32
    %c0_i32_0 = arith.constant 0 : i32
    %2 = arith.cmpi ne, %1, %c0_i32_0 : i32
    scf.if %2 {
      %cst = arith.constant 0.000000e+00 : f32
      %17 = vector.broadcast %cst : f32 to vector<16x16xf32>
      %c0_12 = arith.constant 0 : index
      %c0_13 = arith.constant 0 : index
      %18 = vector.load %arg10[%c0_12, %c0_13] : memref<16x16xf32, #tpu.memory_space<vmem>>, vector<16x16xf32>
      tpu.vector_store %arg10[%c0_12, %c0_13], %17 {strides = array<i32>} : memref<16x16xf32, #tpu.memory_space<vmem>>, vector<16x16xf32>,
    } else {
    }
    %c0 = arith.constant 0 : index
    %c0_1 = arith.constant 0 : index
    %3 = vector.load %arg4[%c0, %c0_1] : memref<16x16xf32, #tpu.memory_space<vmem>>, vector<16x16xf32>
    %c0_2 = arith.constant 0 : index
    %c0_3 = arith.constant 0 : index
    %4 = vector.load %arg2[%c0_2, %c0_3] : memref<16x16xf32, #tpu.memory_space<vmem>>, vector<16x16xf32>
    %5 = arith.subf %4, %3 : vector<16x16xf32>
    %c0_4 = arith.constant 0 : index
    %c0_5 = arith.constant 0 : index
    %6 = vector.load %arg3[%c0_4, %c0_5] : memref<16x16xf32, #tpu.memory_space<vmem>>, vector<16x16xf32>
    %7 = arith.subf %6, %3 : vector<16x16xf32>
    %c0_6 = arith.constant 0 : index
    %c0_7 = arith.constant 0 : index
    %8 = vector.load %arg10[%c0_6, %c0_7] : memref<16x16xf32, #tpu.memory_space<vmem>>, vector<16x16xf32>
    %9 = arith.mulf %5, %5 : vector<16x16xf32>
    %10 = arith.mulf %7, %7 : vector<16x16xf32>
    %11 = arith.addf %9, %10 : vector<16x16xf32>
    %12 = arith.addf %8, %11 : vector<16x16xf32>
    %c0_8 = arith.constant 0 : index
    %c0_9 = arith.constant 0 : index
    %13 = vector.load %arg10[%c0_8, %c0_9] : memref<16x16xf32, #tpu.memory_space<vmem>>, vector<16x16xf32>
    tpu.vector_store %arg10[%c0_8, %c0_9], %12 {strides = array<i32>} : memref<16x16xf32, #tpu.memory_space<vmem>>, vector<16x16xf32>,
    %c0_i32_10 = arith.constant 0 : i32
    %14 = arith.cmpi eq, %arg1, %c0_i32_10 : i32
    %15 = arith.extui %14 : i1 to i32
    %c0_i32_11 = arith.constant 0 : i32
    %16 = arith.cmpi ne, %15, %c0_i32_11 : i32
    scf.if %16 {
      %c0_12 = arith.constant 0 : index
      %c0_13 = arith.constant 0 : index
      %17 = vector.load %arg10[%c0_12, %c0_13] : memref<16x16xf32, #tpu.memory_space<vmem>>, vector<16x16xf32>
      %18 = vector.shape_cast %17 : vector<16x16xf32> to vector<1x16x16xf32>
      %cst = arith.constant dense<0.000000e+00> : vector<1xf32>
      %19 = vector.multi_reduction <add>, %18, %cst [1, 2] : vector<1x16x16xf32> to vector<1xf32>
      %20 = vector.shape_cast %19 : vector<1xf32> to vector<1x1x1xf32>
      %21 = vector.extract %20[0, 0, 0] : f32 from vector<1x1x1xf32>
      %22 = vector.broadcast %21 : f32 to vector<1x1xf32>
      %cst_14 = arith.constant 3.906250e-03 : f32
      %23 = vector.broadcast %cst_14 : f32 to vector<1x1xf32>
      %24 = arith.mulf %22, %23 : vector<1x1xf32>
      %c0_i32_15 = arith.constant 0 : i32
      %25 = arith.cmpi eq, %arg0, %c0_i32_15 : i32
      %cst_16 = arith.constant 1.000000e+00 : f32
      %cst_17 = arith.constant 0.000000e+00 : f32
      %26 = arith.select %25, %cst_16, %cst_17 : f32
      %c0_18 = arith.constant 0 : index
      %c0_19 = arith.constant 0 : index
      %27 = vector.load %arg5[%c0_18, %c0_19] : memref<2x16xf32, #tpu.memory_space<vmem>>, vector<2x16xf32>
      %c0_20 = arith.constant 0 : index
      %c0_21 = arith.constant 0 : index
      %28 = vector.load %arg6[%c0_20, %c0_21] : memref<2x16xf32, #tpu.memory_space<vmem>>, vector<2x16xf32>
      %cst_22 = arith.constant 0.000000e+00 : f32
      %29 = vector.broadcast %cst_22 : f32 to vector<2x16xf32>
      %30 = arith.maximumf %27, %29 : vector<2x16xf32>
      %31 = arith.mulf %27, %28 : vector<2x16xf32>
      %32 = arith.subf %30, %31 : vector<2x16xf32>
      %33 = math.absf %27 : vector<2x16xf32>
      %cst_23 = arith.constant 0.000000e+00 : f32
      %34 = vector.broadcast %cst_23 : f32 to vector<2x16xf32>
      %35 = arith.subf %34, %33 : vector<2x16xf32>
      %36 = math.exp %35 : vector<2x16xf32>
      %37 = math.log1p %36 : vector<2x16xf32>
      %38 = arith.addf %32, %37 : vector<2x16xf32>
      %39 = vector.shape_cast %38 : vector<2x16xf32> to vector<1x2x16xf32>
      %cst_24 = arith.constant dense<0.000000e+00> : vector<1xf32>
      %40 = vector.multi_reduction <add>, %39, %cst_24 [1, 2] : vector<1x2x16xf32> to vector<1xf32>
      %41 = vector.shape_cast %40 : vector<1xf32> to vector<1x1x1xf32>
      %42 = vector.extract %41[0, 0, 0] : f32 from vector<1x1x1xf32>
      %43 = vector.broadcast %42 : f32 to vector<1x1xf32>
      %cst_25 = arith.constant 3.125000e-02 : f32
      %44 = vector.broadcast %cst_25 : f32 to vector<1x1xf32>
      %45 = arith.mulf %43, %44 : vector<1x1xf32>
      %46 = vector.broadcast %26 : f32 to vector<1x1xf32>
      %47 = arith.mulf %45, %46 : vector<1x1xf32>
      %c0_26 = arith.constant 0 : index
      %c0_27 = arith.constant 0 : index
      %48 = vector.load %arg7[%c0_26, %c0_27] : memref<2x32xf32, #tpu.memory_space<vmem>>, vector<2x32xf32>
      %c0_28 = arith.constant 0 : index
      %c0_29 = arith.constant 0 : index
      %49 = vector.load %arg8[%c0_28, %c0_29] : memref<2x32xf32, #tpu.memory_space<vmem>>, vector<2x32xf32>
      %cst_30 = arith.constant 1.000000e+00 : f32
      %50 = vector.broadcast %cst_30 : f32 to vector<2x32xf32>
      %51 = arith.addf %50, %49 : vector<2x32xf32>
      %52 = arith.mulf %48, %48 : vector<2x32xf32>
      %53 = arith.subf %51, %52 : vector<2x32xf32>
      %54 = math.exp %49 : vector<2x32xf32>
      %55 = arith.subf %53, %54 : vector<2x32xf32>
      %56 = vector.shape_cast %55 : vector<2x32xf32> to vector<1x2x32xf32>
      %cst_31 = arith.constant dense<0.000000e+00> : vector<1xf32>
      %57 = vector.multi_reduction <add>, %56, %cst_31 [1, 2] : vector<1x2x32xf32> to vector<1xf32>
      %58 = vector.shape_cast %57 : vector<1xf32> to vector<1x1x1xf32>
      %59 = vector.extract %58[0, 0, 0] : f32 from vector<1x1x1xf32>
      %60 = vector.broadcast %59 : f32 to vector<1x1xf32>
      %cst_32 = arith.constant -5.000000e-01 : f32
      %61 = vector.broadcast %cst_32 : f32 to vector<1x1xf32>
      %62 = arith.mulf %61, %60 : vector<1x1xf32>
      %63 = vector.broadcast %26 : f32 to vector<1x1xf32>
      %64 = arith.mulf %62, %63 : vector<1x1xf32>
      %65 = tpu.iota {dimensions = array<i32: 1>} : vector<8x128xi32>
      %c0_i32_33 = arith.constant 0 : i32
      %66 = vector.broadcast %c0_i32_33 : i32 to vector<8x128xi32>
      %67 = arith.cmpi eq, %65, %66 : vector<8x128xi32>
      %cst_34 = arith.constant 0.000000e+00 : f32
      %68 = vector.shape_cast %24 : vector<1x1xf32> to vector<1x1xf32>
      %69 = vector.broadcast %68 : vector<1x1xf32> to vector<8x128xf32>
      %70 = vector.broadcast %cst_34 : f32 to vector<8x128xf32>
      %71 = arith.select %67, %69, %70 : vector<8x128xi1>, vector<8x128xf32>
      %c1_i32 = arith.constant 1 : i32
      %72 = vector.broadcast %c1_i32 : i32 to vector<8x128xi32>
      %73 = arith.cmpi eq, %65, %72 : vector<8x128xi32>
      %cst_35 = arith.constant 0.000000e+00 : f32
      %74 = vector.shape_cast %47 : vector<1x1xf32> to vector<1x1xf32>
      %75 = vector.broadcast %74 : vector<1x1xf32> to vector<8x128xf32>
      %76 = vector.broadcast %cst_35 : f32 to vector<8x128xf32>
      %77 = arith.select %73, %75, %76 : vector<8x128xi1>, vector<8x128xf32>
      %78 = arith.addf %71, %77 : vector<8x128xf32>
      %c2_i32 = arith.constant 2 : i32
      %79 = vector.broadcast %c2_i32 : i32 to vector<8x128xi32>
      %80 = arith.cmpi eq, %65, %79 : vector<8x128xi32>
      %cst_36 = arith.constant 0.000000e+00 : f32
      %81 = vector.shape_cast %64 : vector<1x1xf32> to vector<1x1xf32>
      %82 = vector.broadcast %81 : vector<1x1xf32> to vector<8x128xf32>
      %83 = vector.broadcast %cst_36 : f32 to vector<8x128xf32>
      %84 = arith.select %80, %82, %83 : vector<8x128xi1>, vector<8x128xf32>
      %85 = arith.addf %78, %84 : vector<8x128xf32>
      %c0_37 = arith.constant 0 : index
      %c0_38 = arith.constant 0 : index
      %86 = vector.load %arg9[%c0_37, %c0_38] : memref<8x128xf32, #tpu.memory_space<vmem>>, vector<8x128xf32>
      tpu.vector_store %arg9[%c0_37, %c0_38], %85 {strides = array<i32>} : memref<8x128xf32, #tpu.memory_space<vmem>>, vector<8x128xf32>,
    } else {
    }
    return
  }
  func.func @transform_0(%arg0: i32, %arg1: i32) -> (i32, i32) {
    %c1_i32 = arith.constant 1 : i32
    %0 = arith.muli %arg0, %c1_i32 : i32
    %1 = arith.addi %0, %arg1 : i32
    %c0_i32 = arith.constant 0 : i32
    %c0_i32_0 = arith.constant 0 : i32
    return %1, %c0_i32 : i32, i32
  }
  func.func @transform_1(%arg0: i32, %arg1: i32) -> (i32, i32) {
    %c1_i32 = arith.constant 1 : i32
    %0 = arith.muli %arg0, %c1_i32 : i32
    %1 = arith.addi %0, %arg1 : i32
    %c0_i32 = arith.constant 0 : i32
    %c0_i32_0 = arith.constant 0 : i32
    return %1, %c0_i32 : i32, i32
  }
  func.func @transform_2(%arg0: i32, %arg1: i32) -> (i32, i32) {
    %c1_i32 = arith.constant 1 : i32
    %0 = arith.muli %arg0, %c1_i32 : i32
    %1 = arith.addi %0, %arg1 : i32
    %c0_i32 = arith.constant 0 : i32
    %c0_i32_0 = arith.constant 0 : i32
    return %1, %c0_i32 : i32, i32
  }
  func.func @transform_3(%arg0: i32, %arg1: i32) -> (i32, i32) {
    %c0_i32 = arith.constant 0 : i32
    %c0_i32_0 = arith.constant 0 : i32
    %c0_i32_1 = arith.constant 0 : i32
    return %c0_i32, %c0_i32_0 : i32, i32
  }
  func.func @transform_4(%arg0: i32, %arg1: i32) -> (i32, i32) {
    %c0_i32 = arith.constant 0 : i32
    %c0_i32_0 = arith.constant 0 : i32
    %c0_i32_1 = arith.constant 0 : i32
    return %c0_i32, %c0_i32_0 : i32, i32
  }
  func.func @transform_5(%arg0: i32, %arg1: i32) -> (i32, i32) {
    %c0_i32 = arith.constant 0 : i32
    %c0_i32_0 = arith.constant 0 : i32
    %c0_i32_1 = arith.constant 0 : i32
    return %c0_i32, %c0_i32_0 : i32, i32
  }
  func.func @transform_6(%arg0: i32, %arg1: i32) -> (i32, i32) {
    %c0_i32 = arith.constant 0 : i32
    %c0_i32_0 = arith.constant 0 : i32
    %c0_i32_1 = arith.constant 0 : i32
    return %c0_i32, %c0_i32_0 : i32, i32
  }
  func.func @transform_7(%arg0: i32, %arg1: i32) -> (i32, i32) {
    %c0_i32 = arith.constant 0 : i32
    %c0_i32_0 = arith.constant 0 : i32
    return %arg0, %c0_i32 : i32, i32
  }
}

</mosaic_0001>

<llo_original>
// kernel: tpu_custom_call.1
$region0: #{tpu_custom_call.1}
  #allocation0 [shape = 'u32[]', space=smem, size = 0x4, offset = 0x4, fixed_abs, tag = 'smem constant byte address 0x4 - core index']
  #allocation1 [shape = 'u32[144,128]{1,0:T(1,128)}', space=vmem, size = 0x12000, scoped, tag = 'internal scratch']
  #allocation2 [shape = 'f32[16,16]{1,0:T(8,128)}', space=vmem, size = 0x2000, scoped, tag = 'scratch operand']
  %s0 = inlined_call_operand.hbm [shape: f32[16,16], index: 0, kind: input, shape index: {}]
  %s1 = inlined_call_operand.hbm [shape: f32[16,16], index: 1, kind: input, shape index: {}]
  %s2 = inlined_call_operand.hbm [shape: f32[16,16], index: 2, kind: input, shape index: {}]
  %s3 = inlined_call_operand.vmem [shape: f32[2,16], index: 3, kind: input, shape index: {}]
  %s4 = inlined_call_operand.vmem [shape: f32[2,16], index: 4, kind: input, shape index: {}]
  %s5 = inlined_call_operand.vmem [shape: f32[2,32], index: 5, kind: input, shape index: {}]
  %s6 = inlined_call_operand.vmem [shape: f32[2,32], index: 6, kind: input, shape index: {}]
  %s7 = inlined_call_operand.hbm [shape: f32[8,128], index: 7, kind: output, shape index: {}]
  %s8 = sld [smem:[#allocation0]]
  $region58: #{tpu_custom_call.1} parent=0
    _
  %s10 = ssub.s32 1, %s8
  %s11 = scalar_select 0, %s10, %s8
  $region1: #{tpu_custom_call.1} parent=0
    #allocation3 [shape = 'u8[8192]{0}', space=vmem, size = 0x2000, scoped, tag = 'input window, operand 0, single buffered']
    #allocation4 [shape = 's32[1]{0}', space=sflag, size = 0x4, scoped, tag = 'scoped memory for tpu_custom_call.1']
    #allocation5 [shape = 's32[1]{0}', space=sflag, size = 0x4, scoped, tag = 'scoped memory for tpu_custom_call.1']
    #allocation6 [shape = 'u8[8192]{0}', space=vmem, size = 0x2000, scoped, tag = 'input window, operand 1, single buffered']
    #allocation7 [shape = 's32[1]{0}', space=sflag, size = 0x4, scoped, tag = 'scoped memory for tpu_custom_call.1']
    #allocation8 [shape = 'u8[8192]{0}', space=vmem, size = 0x2000, scoped, tag = 'input window, operand 2, single buffered']
    #allocation9 [shape = 'u8[4096]{0}', space=vmem, size = 0x1000, scoped, tag = 'output window, operand 0, single buffered']
    %12 = vsyncpa [#allocation4], 0
    %13 = vsyncpa [#allocation7], 0
    %14 = vsyncpa [#allocation5], 0
    // Predicated region
    $region2: #{tpu_custom_call.1} parent=1 // pred_check
      _
    $region3: #{tpu_custom_call.1} parent=1 // pred_check_branch
      %16 = sbr.rel (0) target = $region5
    $region4: #{tpu_custom_call.1} parent=1 // pred_region
      %s17 = sadd.s32 0, 0
      %s18 = smul.u32 2, %s17
      %s20 = ssub.s32 256, 256
      %21 = vsyncadd [#allocation4], %s20
      %s22 = smul.addr %s18, 128
      %s23 = scalar_lea.hbm %s0, %s22
      %s24 = sshll.u32 [#allocation3], 4
      %s25 = int_to_ptr.vmem [resolvable:$true] %s24
      %30 = dma.hbm_to_vmem [thread:$0]  %s23, 256, %s25, [#allocation4], 128, 128, 8
    $region5: #{tpu_custom_call.1} parent=1 // pred_fallthru
      _
    // Predicated region
    $region6: #{tpu_custom_call.1} parent=1 // pred_check
      _
    $region7: #{tpu_custom_call.1} parent=1 // pred_check_branch
      %32 = sbr.rel (0) target = $region9
    $region8: #{tpu_custom_call.1} parent=1 // pred_region
      %s33 = sadd.s32 0, 0
      %s34 = smul.u32 2, %s33
      %s36 = ssub.s32 256, 256
      %37 = vsyncadd [#allocation7], %s36
      %s38 = smul.addr %s34, 128
      %s39 = scalar_lea.hbm %s1, %s38
      %s40 = sshll.u32 [#allocation6], 4
      %s41 = int_to_ptr.vmem [resolvable:$true] %s40
      %46 = dma.hbm_to_vmem [thread:$0]  %s39, 256, %s41, [#allocation7], 128, 128, 8
    $region9: #{tpu_custom_call.1} parent=1 // pred_fallthru
      _
    // Predicated region
    $region10: #{tpu_custom_call.1} parent=1 // pred_check
      _
    $region11: #{tpu_custom_call.1} parent=1 // pred_check_branch
      %48 = sbr.rel (0) target = $region13
    $region12: #{tpu_custom_call.1} parent=1 // pred_region
      %s49 = sadd.s32 0, 0
      %s50 = smul.u32 2, %s49
      %s52 = ssub.s32 256, 256
      %53 = vsyncadd [#allocation7], %s52
      %s54 = smul.addr %s50, 128
      %s55 = scalar_lea.hbm %s2, %s54
      %s56 = sshll.u32 [#allocation8], 4
      %s57 = int_to_ptr.vmem [resolvable:$true] %s56
      %62 = dma.hbm_to_vmem [thread:$0]  %s55, 256, %s57, [#allocation7], 128, 128, 8
    $region13: #{tpu_custom_call.1} parent=1 // pred_fallthru
      _
    // Predicated region
    $region14: #{tpu_custom_call.1} parent=1 // pred_check
      _
    $region15: #{tpu_custom_call.1} parent=1 // pred_check_branch
      %64 = sbr.rel (0) target = $region17
    $region16: #{tpu_custom_call.1} parent=1 // pred_region
      _
    $region17: #{tpu_custom_call.1} parent=1 // pred_fallthru
      _
    // Predicated region
    $region18: #{tpu_custom_call.1} parent=1 // pred_check
      _
    $region19: #{tpu_custom_call.1} parent=1 // pred_check_branch
      %66 = sbr.rel (0) target = $region21
    $region20: #{tpu_custom_call.1} parent=1 // pred_region
      _
    $region21: #{tpu_custom_call.1} parent=1 // pred_fallthru
      _
    // Predicated region
    $region22: #{tpu_custom_call.1} parent=1 // pred_check
      _
    $region23: #{tpu_custom_call.1} parent=1 // pred_check_branch
      %68 = sbr.rel (0) target = $region25
    $region24: #{tpu_custom_call.1} parent=1 // pred_region
      _
    $region25: #{tpu_custom_call.1} parent=1 // pred_fallthru
      _
    // Predicated region
    $region26: #{tpu_custom_call.1} parent=1 // pred_check
      _
    $region27: #{tpu_custom_call.1} parent=1 // pred_check_branch
      %70 = sbr.rel (0) target = $region29
    $region28: #{tpu_custom_call.1} parent=1 // pred_region
      _
    $region29: #{tpu_custom_call.1} parent=1 // pred_fallthru
      _
    // Predicated region
    $region30: #{tpu_custom_call.1} parent=1 // pred_check
      _
    $region31: #{tpu_custom_call.1} parent=1 // pred_check_branch
      %72 = sbr.rel (0) target = $region33
    $region32: #{tpu_custom_call.1} parent=1 // pred_region
      %73 = dma.done [#allocation4], 256
    $region33: #{tpu_custom_call.1} parent=1 // pred_fallthru
      _
    // Predicated region
    $region34: #{tpu_custom_call.1} parent=1 // pred_check
      _
    $region35: #{tpu_custom_call.1} parent=1 // pred_check_branch
      %75 = sbr.rel (0) target = $region37
    $region36: #{tpu_custom_call.1} parent=1 // pred_region
      %76 = dma.done [#allocation7], 256
    $region37: #{tpu_custom_call.1} parent=1 // pred_fallthru
      _
    // Predicated region
    $region38: #{tpu_custom_call.1} parent=1 // pred_check
      _
    $region39: #{tpu_custom_call.1} parent=1 // pred_check_branch
      %78 = sbr.rel (0) target = $region41
    $region40: #{tpu_custom_call.1} parent=1 // pred_region
      %79 = dma.done [#allocation7], 256
    $region41: #{tpu_custom_call.1} parent=1 // pred_fallthru
      _
    %s80 = sadd.s32 0, 0
    %s81 = smul.u32 2, %s80
    %s82 = sadd.s32 0, 0
    %s83 = smul.u32 2, %s82
    %s84 = sadd.s32 0, 0
    %s85 = smul.u32 2, %s84
    %p86 = scmp.eq.s32.totalorder 0, 0
    // Predicated region
    $region42: #{tpu_custom_call.1} parent=1 // pred_check
      %p87 = pneg %p86
    $region43: #{tpu_custom_call.1} parent=1 // pred_check_branch
      %89 = sbr.rel (%p87) target = $region45
    $region44: #{tpu_custom_call.1} parent=1 // pred_region
      %vm90 = vcmask 130048
      %91 = vst.msk [vmem:[#allocation2] sm:$0xff] %vm90, 0.0
      %92 = vst.msk [vmem:[#allocation2 + $0x8] sm:$0xff] %vm90, 0.0
    $region45: #{tpu_custom_call.1} parent=1 // pred_fallthru
      _
    %v93 = vld [vmem:[#allocation8] sm:$0xff]
    %v94 = vld [vmem:[#allocation8 + $0x8] sm:$0xff]
    %v95 = vld [vmem:[#allocation3] sm:$0xff]
    %v96 = vld [vmem:[#allocation3 + $0x8] sm:$0xff]
    %v97 = vsub.f32 %v95, %v93
    %v98 = vsub.f32 %v96, %v94
    %v99 = vld [vmem:[#allocation6] sm:$0xff]
    %v100 = vld [vmem:[#allocation6 + $0x8] sm:$0xff]
    %v101 = vsub.f32 %v99, %v93
    %v102 = vsub.f32 %v100, %v94
    %v103 = vld [vmem:[#allocation2] sm:$0xff]
    %v104 = vld [vmem:[#allocation2 + $0x8] sm:$0xff]
    %v105 = vmul.f32 %v97, %v97
    %v106 = vmul.f32 %v98, %v98
    %v107 = vmul.f32 %v101, %v101
    %v108 = vmul.f32 %v102, %v102
    %v109 = vadd.f32 %v105, %v107
    %v110 = vadd.f32 %v106, %v108
    %v111 = vadd.f32 %v103, %v109
    %v112 = vadd.f32 %v104, %v110
    %vm113 = vcmask 130048
    %114 = vst.msk [vmem:[#allocation2] sm:$0xff] %vm113, %v111
    %115 = vst.msk [vmem:[#allocation2 + $0x8] sm:$0xff] %vm113, %v112
    // Predicated region
    $region46: #{tpu_custom_call.1} parent=1 // pred_check
      %p116 = pneg %p86
    $region47: #{tpu_custom_call.1} parent=1 // pred_check_branch
      %118 = sbr.rel (%p116) target = $region49
    $region48: #{tpu_custom_call.1} parent=1 // pred_region
      %v119 = vld [vmem:[#allocation2] sm:$0xff]
      %v120 = vld [vmem:[#allocation2 + $0x8] sm:$0xff]
      %v121 = vsel %vm113, %v119, 0.0
      %v122 = vsel %vm113, %v120, 0.0
      %v123 = vadd.f32 %v121, %v122
      %124 = vadd.xlane.f32.xlu0 %v123
      %v125 = vpop.xlane.xlu0 %124
      %v126 = vrot.slane %v125, 4
      %v127 = vadd.f32 %v125, %v126
      %v128 = vrot.slane %v127, 2
      %v129 = vadd.f32 %v127, %v128
      %v130 = vrot.slane %v129, 1
      %v131 = vadd.f32 %v129, %v130
      %s132 = vtos %v131
      %v133 = vstv %s132
      %v134 = vmul.f32 %v133, 0.00390625
      %p135 = scmp.eq.s32.totalorder 0, 0
      %s136 = scalar_select %p135, 1.0, 0.0
      %v137 = vld [vmem:[%s3] sm:$0x3]
      %v138 = vld [vmem:[%s4] sm:$0x3]
      %v139 = vmax.f32 %v137, 0.0
      %v140 = vmul.f32 %v137, %v138
      %v141 = vsub.f32 %v139, %v140
      %v142 = vand.u32 2147483647, %v137
      %v143 = vsub.f32 0.0, %v142
      %v144 = vmul.f32 %v143, 1.442695
      %v145 = vpow.pop %v144
      %v146 = vadd.f32 %v145, 1.0
      %v147 = vlog2.pop %v146
      %v148 = vmul.f32 %v147, 0.6931472
      %v149 = vmul.f32 -0.5, %v145
      %v150 = vadd.f32 %v149, 1.0
      %v151 = vmul.f32 %v150, %v145
      %v152 = vand.u32 2147483647, %v145
      %vm153 = vcmp.lt.f32.partialorder %v152, 0.0004427343
      %v154 = vsel %vm153, %v151, %v148
      %v155 = vadd.f32 %v141, %v154
      %vm156 = vcmask 123904
      %v157 = vsel %vm156, %v155, 0.0
      %158 = vadd.xlane.f32.xlu0 %v157
      %v159 = vpop.xlane.xlu0 %158
      %v160 = vrot.slane %v159, 4
      %v161 = vadd.f32 %v159, %v160
      %v162 = vrot.slane %v161, 2
      %v163 = vadd.f32 %v161, %v162
      %v164 = vrot.slane %v163, 1
      %v165 = vadd.f32 %v163, %v164
      %s166 = vtos %v165
      %v167 = vstv %s166
      %v168 = vmul.f32 %v167, 0.03125
      %v169 = vstv %s136
      %v170 = vmul.f32 %v168, %v169
      %v171 = vld [vmem:[%s5] sm:$0x3]
      %v172 = vld [vmem:[%s6] sm:$0x3]
      %v173 = vadd.f32 %v172, 1.0
      %v174 = vmul.f32 %v171, %v171
      %v175 = vsub.f32 %v173, %v174
      %v176 = vmul.f32 %v172, 1.442695
      %v177 = vpow.pop %v176
      %v178 = vsub.f32 %v175, %v177
      %vm179 = vcmask 254976
      %v180 = vsel %vm179, %v178, 0.0
      %181 = vadd.xlane.f32.xlu0 %v180
      %v182 = vpop.xlane.xlu0 %181
      %v183 = vrot.slane %v182, 4
      %v184 = vadd.f32 %v182, %v183
      %v185 = vrot.slane %v184, 2
      %v186 = vadd.f32 %v184, %v185
      %v187 = vrot.slane %v186, 1
      %v188 = vadd.f32 %v186, %v187
      %s189 = vtos %v188
      %v190 = vstv %s189
      %v191 = vmul.f32 %v190, -0.5
      %v192 = vmul.f32 %v191, %v169
      %v193 = vlaneseq
      %v194 = vand.u32 %v193, 127
      %vm195 = vcmp.eq.s32.totalorder %v194, 0
      %v196 = vsel %vm195, %v134, 0.0
      %vm197 = vcmp.eq.s32.totalorder %v194, 1
      %v198 = vsel %vm197, %v170, 0.0
      %v199 = vadd.f32 %v196, %v198
      %vm200 = vcmp.eq.s32.totalorder %v194, 2
      %v201 = vsel %vm200, %v192, 0.0
      %v202 = vadd.f32 %v199, %v201
      %203 = vst [vmem:[#allocation9] sm:$0xff] %v202
    $region49: #{tpu_custom_call.1} parent=1 // pred_fallthru
      _
    // Predicated region
    $region50: #{tpu_custom_call.1} parent=1 // pred_check
      _
    $region51: #{tpu_custom_call.1} parent=1 // pred_check_branch
      %205 = sbr.rel (0) target = $region53
    $region52: #{tpu_custom_call.1} parent=1 // pred_region
      %s207 = ssub.s32 128, 128
      %208 = vsyncadd [#allocation5], %s207
      %s210 = sshll.u32 [#allocation9], 4
      %s211 = int_to_ptr.vmem [resolvable:$true] %s210
      %213 = dma.vmem_to_hbm [thread:$0]  %s211, 128, %s7, [#allocation5]
    $region53: #{tpu_custom_call.1} parent=1 // pred_fallthru
      _
    // Predicated region
    $region54: #{tpu_custom_call.1} parent=1 // pred_check
      _
    $region55: #{tpu_custom_call.1} parent=1 // pred_check_branch
      %215 = sbr.rel (0) target = $region57
    $region56: #{tpu_custom_call.1} parent=1 // pred_region
      %216 = dma.done [#allocation5], 128
    $region57: #{tpu_custom_call.1} parent=1 // pred_fallthru
      _
    %217 = vsyncpa [#allocation4], 1
    %218 = vsyncpa [#allocation7], 1
    %219 = vsyncpa [#allocation5], 1

</llo_original>
